<compile_context>
chip_gen: v6e
topology: v6e:2x2x1
jax: 0.10.0
libtpu: 0.0.40
codegen_flags: <defaults>
</compile_context>

<pallas_src>
import jax
import jax.numpy as jnp
from jax.experimental import pallas as pl
from jax.experimental.pallas import tpu as pltpu


def _mul_bcast_kernel(x_ref, y_ref, o_ref):
    # x_ref/o_ref: (gb, 3*HW), y_ref: (gb, HW).  Static unroll over the 3
    # repeated slabs; each slab is an elementwise VPU multiply by the y row.
    hw = y_ref.shape[-1]
    yv = y_ref[...]
    for r in range(3):
        sl = slice(r * hw, (r + 1) * hw)
        o_ref[:, sl] = x_ref[:, sl] * yv


def multiply_layer(x, y):
    """Pallas implementation of MultiplyLayer.forward(x, y).

    x: (B, C, H, W), y: (B, C1, H, W) with C//2 == 3 * (C1//2).
    Returns array of shape (B, C, H, W).
    """
    B, C, H, W = x.shape
    B1, C1, H1, W1 = y.shape
    assert (B, H, W) == (B1, H1, W1), "batch/spatial dims must match"
    assert C % 2 == 0 and C1 % 2 == 0, "channel dims must be even"
    half_c, half_c1 = C // 2, C1 // 2
    assert half_c == 3 * half_c1, "x channel half must be 3x y channel half"

    HW = H * W
    G = B * C1  # one row per (batch, half, y-channel) group
    itemsize = jnp.dtype(x.dtype).itemsize

    # Row-major reshapes are free: x channel c = h*(3*half_c1) + 3*k + r pairs
    # with y channel h*half_c1 + k, so both map to group row g = b*C1 + h*half_c1 + k.
    x2 = x.reshape(G, 3 * HW)
    y2 = y.reshape(G, HW)

    # Row-block size: ~2 MiB of x per buffer.  Double-buffered x + y + out is
    # then ~10 MiB total, safely under scoped-VMEM defaults on v5e/v6e/v7x.
    sublane_mult = 8 * max(1, 4 // itemsize)  # 8 (f32) / 16 (bf16) / 32 (i8)
    target_x_tile_bytes = 2 * 1024 * 1024
    rows_fit = max(1, target_x_tile_bytes // (3 * HW * itemsize))
    if rows_fit >= G or G <= sublane_mult:
        gb = G  # whole array in one (or few) steps; full-dim block is always legal
    else:
        gb = max(sublane_mult, (rows_fit // sublane_mult) * sublane_mult)

    grid = (pl.cdiv(G, gb),)

    out2 = pl.pallas_call(
        _mul_bcast_kernel,
        out_shape=jax.ShapeDtypeStruct((G, 3 * HW), x.dtype),
        grid=grid,
        in_specs=[
            pl.BlockSpec((gb, 3 * HW), lambda i: (i, 0)),
            pl.BlockSpec((gb, HW), lambda i: (i, 0)),
        ],
        out_specs=pl.BlockSpec((gb, 3 * HW), lambda i: (i, 0)),
        compiler_params=pltpu.CompilerParams(
            dimension_semantics=("parallel",),
        ),
    )(x2, y2)

    return out2.reshape(B, C, H, W)


def _reference(x, y):
    # Pure-JAX reference mirroring the PyTorch semantics.
    B, C, H, W = x.shape
    C1 = y.shape[1]
    hc, hc1 = C // 2, C1 // 2
    y1 = jnp.repeat(y[:, :hc1], 3, axis=1)
    y2 = jnp.repeat(y[:, hc1:], 3, axis=1)
    return jnp.concatenate([x[:, :hc] * y1, x[:, hc:] * y2], axis=1)


if __name__ == "__main__":
    key = jax.random.PRNGKey(0)
    kx, ky = jax.random.split(key)
    # x channels = 12 (half = 6), y channels = 4 (half = 2), 6 == 3 * 2.
    x = jax.random.normal(kx, (2, 12, 16, 16), dtype=jnp.float32)
    y = jax.random.normal(ky, (2, 4, 16, 16), dtype=jnp.float32)

    out = multiply_layer(x, y)
    out = jax.block_until_ready(out)

    ref = _reference(x, y)
    assert out.shape == x.shape
    assert jnp.allclose(out, ref, atol=1e-6, rtol=1e-6)
    print("KERNEL_OK")
</pallas_src>

<mosaic_0001>
module attributes {stable_mosaic.version = 11 : i64} {
  func.func @_mul_bcast_kernel(%arg0: i32, %arg1: memref<8x768xf32, #tpu.memory_space<vmem>>, %arg2: memref<8x256xf32, #tpu.memory_space<vmem>>, %arg3: memref<8x768xf32, #tpu.memory_space<vmem>>) attributes {dimension_semantics = [#tpu.dimension_semantics<parallel>], iteration_bounds = array<i64: 1>, scalar_prefetch = 0 : i64, scratch_operands = 0 : i64, tpu.core_type = #tpu.core_type<tc>, window_params = [{transform_indices = @transform_0, window_bounds = array<i64: 8, 768>}, {transform_indices = @transform_1, window_bounds = array<i64: 8, 256>}, {transform_indices = @transform_2, window_bounds = array<i64: 8, 768>}]} {
    %c0 = arith.constant 0 : index
    %c0_0 = arith.constant 0 : index
    %0 = vector.load %arg2[%c0, %c0_0] : memref<8x256xf32, #tpu.memory_space<vmem>>, vector<8x256xf32>
    %c0_1 = arith.constant 0 : index
    %c0_2 = arith.constant 0 : index
    %1 = vector.load %arg1[%c0_1, %c0_2] : memref<8x768xf32, #tpu.memory_space<vmem>>, vector<8x256xf32>
    %2 = arith.mulf %1, %0 : vector<8x256xf32>
    %c0_3 = arith.constant 0 : index
    %c0_4 = arith.constant 0 : index
    %3 = vector.load %arg3[%c0_3, %c0_4] : memref<8x768xf32, #tpu.memory_space<vmem>>, vector<8x256xf32>
    tpu.vector_store %arg3[%c0_3, %c0_4], %2 {strides = array<i32>} : memref<8x768xf32, #tpu.memory_space<vmem>>, vector<8x256xf32>,
    %c0_5 = arith.constant 0 : index
    %c256 = arith.constant 256 : index
    %4 = vector.load %arg1[%c0_5, %c256] : memref<8x768xf32, #tpu.memory_space<vmem>>, vector<8x256xf32>
    %5 = arith.mulf %4, %0 : vector<8x256xf32>
    %c0_6 = arith.constant 0 : index
    %c256_7 = arith.constant 256 : index
    %6 = vector.load %arg3[%c0_6, %c256_7] : memref<8x768xf32, #tpu.memory_space<vmem>>, vector<8x256xf32>
    tpu.vector_store %arg3[%c0_6, %c256_7], %5 {strides = array<i32>} : memref<8x768xf32, #tpu.memory_space<vmem>>, vector<8x256xf32>,
    %c0_8 = arith.constant 0 : index
    %c512 = arith.constant 512 : index
    %7 = vector.load %arg1[%c0_8, %c512] : memref<8x768xf32, #tpu.memory_space<vmem>>, vector<8x256xf32>
    %8 = arith.mulf %7, %0 : vector<8x256xf32>
    %c0_9 = arith.constant 0 : index
    %c512_10 = arith.constant 512 : index
    %9 = vector.load %arg3[%c0_9, %c512_10] : memref<8x768xf32, #tpu.memory_space<vmem>>, vector<8x256xf32>
    tpu.vector_store %arg3[%c0_9, %c512_10], %8 {strides = array<i32>} : memref<8x768xf32, #tpu.memory_space<vmem>>, vector<8x256xf32>,
    return
  }
  func.func @transform_0(%arg0: i32) -> (i32, i32) {
    %c0_i32 = arith.constant 0 : i32
    %c0_i32_0 = arith.constant 0 : i32
    return %arg0, %c0_i32 : i32, i32
  }
  func.func @transform_1(%arg0: i32) -> (i32, i32) {
    %c0_i32 = arith.constant 0 : i32
    %c0_i32_0 = arith.constant 0 : i32
    return %arg0, %c0_i32 : i32, i32
  }
  func.func @transform_2(%arg0: i32) -> (i32, i32) {
    %c0_i32 = arith.constant 0 : i32
    %c0_i32_0 = arith.constant 0 : i32
    return %arg0, %c0_i32 : i32, i32
  }
}

</mosaic_0001>

<llo_original>
// kernel: tpu_custom_call.1
$region0: #{tpu_custom_call.1}
  #allocation0 [shape = 'u32[]', space=smem, size = 0x4, offset = 0x4, fixed_abs, tag = 'smem constant byte address 0x4 - core index']
  #allocation1 [shape = 'u32[144,128]{1,0:T(1,128)}', space=vmem, size = 0x12000, scoped, tag = 'internal scratch']
  %s0 = inlined_call_operand.hbm [shape: f32[8,768], index: 0, kind: input, shape index: {}]
  %s1 = inlined_call_operand.hbm [shape: f32[8,256], index: 1, kind: input, shape index: {}]
  %s2 = inlined_call_operand.hbm [shape: f32[8,768], index: 2, kind: output, shape index: {}]
  %s3 = sld [smem:[#allocation0]]
  $region26: #{tpu_custom_call.1} parent=0
    _
  %s5 = ssub.s32 1, %s3
  %s6 = scalar_select 0, %s5, %s3
  $region1: #{tpu_custom_call.1} parent=0
    #allocation2 [shape = 'u8[24576]{0}', space=vmem, size = 0x6000, scoped, tag = 'input window, operand 0, single buffered']
    #allocation3 [shape = 's32[1]{0}', space=sflag, size = 0x4, scoped, tag = 'scoped memory for tpu_custom_call.1']
    #allocation4 [shape = 's32[1]{0}', space=sflag, size = 0x4, scoped, tag = 'scoped memory for tpu_custom_call.1']
    #allocation5 [shape = 'u8[8192]{0}', space=vmem, size = 0x2000, scoped, tag = 'input window, operand 1, single buffered']
    #allocation6 [shape = 's32[1]{0}', space=sflag, size = 0x4, scoped, tag = 'scoped memory for tpu_custom_call.1']
    #allocation7 [shape = 'u8[24576]{0}', space=vmem, size = 0x6000, scoped, tag = 'output window, operand 0, single buffered']
    %7 = vsyncpa [#allocation3], 0
    %8 = vsyncpa [#allocation6], 0
    %9 = vsyncpa [#allocation4], 0
    // Predicated region
    $region2: #{tpu_custom_call.1} parent=1 // pred_check
      _
    $region3: #{tpu_custom_call.1} parent=1 // pred_check_branch
      %11 = sbr.rel (0) target = $region5
    $region4: #{tpu_custom_call.1} parent=1 // pred_region
      %s13 = ssub.s32 768, 768
      %14 = vsyncadd [#allocation3], %s13
      %s16 = sshll.u32 [#allocation2], 4
      %s17 = int_to_ptr.vmem [resolvable:$true] %s16
      %19 = dma.hbm_to_vmem [thread:$0]  %s0, 768, %s17, [#allocation3]
    $region5: #{tpu_custom_call.1} parent=1 // pred_fallthru
      _
    // Predicated region
    $region6: #{tpu_custom_call.1} parent=1 // pred_check
      _
    $region7: #{tpu_custom_call.1} parent=1 // pred_check_branch
      %21 = sbr.rel (0) target = $region9
    $region8: #{tpu_custom_call.1} parent=1 // pred_region
      %s23 = ssub.s32 256, 256
      %24 = vsyncadd [#allocation6], %s23
      %s26 = sshll.u32 [#allocation5], 4
      %s27 = int_to_ptr.vmem [resolvable:$true] %s26
      %29 = dma.hbm_to_vmem [thread:$0]  %s1, 256, %s27, [#allocation6]
    $region9: #{tpu_custom_call.1} parent=1 // pred_fallthru
      _
    // Predicated region
    $region10: #{tpu_custom_call.1} parent=1 // pred_check
      _
    $region11: #{tpu_custom_call.1} parent=1 // pred_check_branch
      %31 = sbr.rel (0) target = $region13
    $region12: #{tpu_custom_call.1} parent=1 // pred_region
      %32 = dma.done [#allocation3], 768
    $region13: #{tpu_custom_call.1} parent=1 // pred_fallthru
      _
    // Predicated region
    $region14: #{tpu_custom_call.1} parent=1 // pred_check
      _
    $region15: #{tpu_custom_call.1} parent=1 // pred_check_branch
      %34 = sbr.rel (0) target = $region17
    $region16: #{tpu_custom_call.1} parent=1 // pred_region
      %35 = dma.done [#allocation6], 256
    $region17: #{tpu_custom_call.1} parent=1 // pred_fallthru
      _
    %v36 = vld [vmem:[#allocation5] sm:$0xff]
    %v37 = vld [vmem:[#allocation5 + $0x8] sm:$0xff]
    %v38 = vld [vmem:[#allocation2] sm:$0xff]
    %v39 = vld [vmem:[#allocation2 + $0x8] sm:$0xff]
    %v40 = vmul.f32 %v38, %v36
    %v41 = vmul.f32 %v39, %v37
    %42 = vst [vmem:[#allocation7] sm:$0xff] %v40
    %43 = vst [vmem:[#allocation7 + $0x8] sm:$0xff] %v41
    %v44 = vld [vmem:[#allocation2 + $0x10] sm:$0xff]
    %v45 = vld [vmem:[#allocation2 + $0x18] sm:$0xff]
    %v46 = vmul.f32 %v44, %v36
    %v47 = vmul.f32 %v45, %v37
    %48 = vst [vmem:[#allocation7 + $0x10] sm:$0xff] %v46
    %49 = vst [vmem:[#allocation7 + $0x18] sm:$0xff] %v47
    %v50 = vld [vmem:[#allocation2 + $0x20] sm:$0xff]
    %v51 = vld [vmem:[#allocation2 + $0x28] sm:$0xff]
    %v52 = vmul.f32 %v50, %v36
    %v53 = vmul.f32 %v51, %v37
    %54 = vst [vmem:[#allocation7 + $0x20] sm:$0xff] %v52
    %55 = vst [vmem:[#allocation7 + $0x28] sm:$0xff] %v53
    // Predicated region
    $region18: #{tpu_custom_call.1} parent=1 // pred_check
      _
    $region19: #{tpu_custom_call.1} parent=1 // pred_check_branch
      %57 = sbr.rel (0) target = $region21
    $region20: #{tpu_custom_call.1} parent=1 // pred_region
      %s59 = ssub.s32 768, 768
      %60 = vsyncadd [#allocation4], %s59
      %s62 = sshll.u32 [#allocation7], 4
      %s63 = int_to_ptr.vmem [resolvable:$true] %s62
      %65 = dma.vmem_to_hbm [thread:$0]  %s63, 768, %s2, [#allocation4]
    $region21: #{tpu_custom_call.1} parent=1 // pred_fallthru
      _
    // Predicated region
    $region22: #{tpu_custom_call.1} parent=1 // pred_check
      _
    $region23: #{tpu_custom_call.1} parent=1 // pred_check_branch
      %67 = sbr.rel (0) target = $region25
    $region24: #{tpu_custom_call.1} parent=1 // pred_region
      %68 = dma.done [#allocation4], 768
    $region25: #{tpu_custom_call.1} parent=1 // pred_fallthru
      _
    %69 = vsyncpa [#allocation3], 1
    %70 = vsyncpa [#allocation6], 1
    %71 = vsyncpa [#allocation4], 1

</llo_original>
